<compile_context>
chip_gen: v7x
topology: tpu7x:2x2x1
jax: 0.10.0
libtpu: 0.0.40
codegen_flags: <defaults>
</compile_context>

<pallas_src>
import functools

import jax
import jax.numpy as jnp
from jax import lax
from jax.experimental import pallas as pl
from jax.experimental.pallas import tpu as pltpu

_EPS = 1e-6


def _round_up(x, m):
    return ((x + m - 1) // m) * m


def _clip_loss_kernel(img_ref, txt_ref, psum_ref, *, n_total, block_rows,
                      num_tiles, mask_tail):
    """One (block_rows, D) tile -> scalar partial sum of cosine similarities."""
    x = img_ref[...].astype(jnp.float32)            # (TN, D)
    y = txt_ref[...].astype(jnp.float32)            # (TN, D)

    # Row reductions hit the XLU; they hide under the tile DMA.
    dot = jnp.sum(x * y, axis=-1, keepdims=True)    # (TN, 1)
    w1 = jnp.sum(x * x, axis=-1, keepdims=True)     # (TN, 1)
    w2 = jnp.sum(y * y, axis=-1, keepdims=True)     # (TN, 1)

    # rsqrt goes to the EUP slot; multiply replaces the per-row divide.
    cos = dot * lax.rsqrt(jnp.maximum(w1 * w2, _EPS * _EPS))

    if mask_tail:
        i = pl.program_id(0)
        is_last = i == num_tiles - 1

        @pl.when(jnp.logical_not(is_last))
        def _():
            psum_ref[0, 0] = jnp.sum(cos)

        @pl.when(is_last)
        def _():
            # Only the ragged last tile pays for the iota + select.  Keep this
            # as a true select: the OOB rows of the last block are unspecified
            # and may produce NaN/Inf in `cos`.
            row = lax.broadcasted_iota(jnp.int32, cos.shape, 0) + i * block_rows
            psum_ref[0, 0] = jnp.sum(jnp.where(row < n_total, cos, 0.0))
    else:
        psum_ref[0, 0] = jnp.sum(cos)


def clip_loss(image_features, text_features, logit_scale=None, logits=None, *,
              block_rows=None):
    """Pallas implementation of ClipLoss.forward. Returns a scalar f32."""
    # TODO(synk): logit_scale / logits and the module's CrossEntropyLoss /
    # Softmax members are unused in the PyTorch forward; kept for call parity.
    del logit_scale, logits
    assert image_features.shape == text_features.shape
    N, D = image_features.shape

    itemsize = jnp.dtype(image_features.dtype).itemsize
    # Sublane packing: 8 rows for 32-bit, 16 for bf16, 32 for 8-bit dtypes.
    sublane = max(8, 32 // max(itemsize, 1))

    # Per-row VMEM footprint: 2 inputs x 2 pipeline buffers (native dtype)
    # plus ~3 full-tile f32 temporaries from the cast / product chain.
    per_row_bytes = 2 * 2 * D * itemsize + 3 * D * 4

    if block_rows is None:
        # ~12 MiB total footprint; 512-1024-row tiles already reach ~85% of
        # HBM roofline on all generations, so there is no win from going big.
        budget_bytes = 12 * 1024 * 1024
        budget_tn = max(((budget_bytes // per_row_bytes) // sublane) * sublane,
                        sublane)
        # Keep >= ~8 tiles when N allows so v7x can shard the "parallel" grid
        # axis across both TensorCores without imbalance.
        shard_tn = _round_up(pl.cdiv(N, 8), sublane)
        tn = max(min(budget_tn, shard_tn), sublane)
    else:
        tn = block_rows

    if tn >= N:
        tn = N                                   # full-extent block (small N)
    else:
        tn = max((tn // sublane) * sublane, sublane)

    num_tiles = pl.cdiv(N, tn)
    mask_tail = (N % tn) != 0

    kernel = functools.partial(
        _clip_loss_kernel, n_total=N, block_rows=tn, num_tiles=num_tiles,
        mask_tail=mask_tail)

    # Scoped-VMEM limit derived from the actual tile footprint (capped at
    # 40 MiB to leave headroom on v7x's 64 MiB VMEM; floor of 16 MiB so the
    # v5e default does not bite).
    tile_footprint = tn * per_row_bytes + (1 << 20)
    vmem_limit = int(min(40 * 1024 * 1024, max(tile_footprint, 16 * 1024 * 1024)))

    cost = pl.CostEstimate(
        flops=6 * N * D,                              # 3 muls + 3 adds per elem
        transcendentals=N,                            # one rsqrt per row
        bytes_accessed=2 * N * D * itemsize + 4 * num_tiles,
    )

    partials = pl.pallas_call(
        kernel,
        out_shape=jax.ShapeDtypeStruct((num_tiles, 1), jnp.float32),
        grid=(num_tiles,),
        in_specs=[
            pl.BlockSpec((tn, D), lambda i: (i, 0)),
            pl.BlockSpec((tn, D), lambda i: (i, 0)),
        ],
        # Per-tile scalar partial sums in SMEM (independent per grid step, so
        # the grid axis can be "parallel" -> both TensorCores on v7x).
        out_specs=pl.BlockSpec((1, 1), lambda i: (i, 0),
                               memory_space=pltpu.SMEM),
        compiler_params=pltpu.CompilerParams(
            dimension_semantics=("parallel",),
            vmem_limit_bytes=vmem_limit,
        ),
        cost_estimate=cost,
    )(image_features, text_features)

    # Tiny finalize in the wrapper: 1 - sum(cos) / N.
    return 1.0 - jnp.sum(partials) / jnp.float32(N)


def _reference(image_features, text_features):
    x = image_features.astype(jnp.float32)
    y = text_features.astype(jnp.float32)
    dot = jnp.sum(x * y, axis=-1)
    w1 = jnp.sum(x * x, axis=-1)
    w2 = jnp.sum(y * y, axis=-1)
    cos = dot / jnp.sqrt(jnp.maximum(w1 * w2, _EPS * _EPS))
    return 1.0 - jnp.sum(cos) / cos.shape[0]


if __name__ == "__main__":
    key = jax.random.PRNGKey(0)
    k1, k2, k3, k4 = jax.random.split(key, 4)

    # Small batch of feature vectors, consistent with the module's forward.
    N, D = 8, 32
    image_features = jax.random.normal(k1, (N, D), dtype=jnp.float32)
    text_features = jax.random.normal(k2, (N, D), dtype=jnp.float32)
    logit_scale = jnp.float32(100.0)          # unused by forward, kept for parity
    logits = jnp.zeros((N, N), jnp.float32)   # unused by forward, kept for parity

    loss = jax.block_until_ready(
        clip_loss(image_features, text_features, logit_scale, logits))
    ref = _reference(image_features, text_features)
    assert jnp.allclose(loss, ref, atol=1e-5, rtol=1e-5), (loss, ref)

    # Exercise the tiled path: multi-step grid with a ragged (masked) tail,
    # where only the last tile pays for the mask.
    N2, D2 = 40, 128
    img2 = jax.random.normal(k3, (N2, D2), dtype=jnp.float32)
    txt2 = jax.random.normal(k4, (N2, D2), dtype=jnp.float32)
    loss2 = jax.block_until_ready(
        clip_loss(img2, txt2, logit_scale, None, block_rows=16))
    ref2 = _reference(img2, txt2)
    assert jnp.allclose(loss2, ref2, atol=1e-5, rtol=1e-5), (loss2, ref2)

    # Exercise the auto-derived tiling (bf16 inputs, exact multiple of tile).
    N3, D3 = 256, 128
    img3 = jax.random.normal(k3, (N3, D3), dtype=jnp.bfloat16)
    txt3 = jax.random.normal(k4, (N3, D3), dtype=jnp.bfloat16)
    loss3 = jax.block_until_ready(clip_loss(img3, txt3))
    ref3 = _reference(img3, txt3)
    assert jnp.allclose(loss3, ref3, atol=5e-3, rtol=5e-3), (loss3, ref3)

    print("KERNEL_OK")
</pallas_src>

<mosaic_0001>
module attributes {stable_mosaic.version = 11 : i64} {
  func.func @_clip_loss_kernel(%arg0: i32, %arg1: memref<8x32xf32, #tpu.memory_space<vmem>>, %arg2: memref<8x32xf32, #tpu.memory_space<vmem>>, %arg3: memref<1x1xf32, #tpu.memory_space<smem>>) attributes {dimension_semantics = [#tpu.dimension_semantics<parallel>], iteration_bounds = array<i64: 1>, scalar_prefetch = 0 : i64, scratch_operands = 0 : i64, tpu.core_type = #tpu.core_type<tc>, window_params = [{transform_indices = @transform_0, window_bounds = array<i64: 8, 32>}, {transform_indices = @transform_1, window_bounds = array<i64: 8, 32>}, {transform_indices = @transform_2, window_bounds = array<i64: 1, 1>}]} {
    %c0 = arith.constant 0 : index
    %c0_0 = arith.constant 0 : index
    %0 = vector.load %arg1[%c0, %c0_0] : memref<8x32xf32, #tpu.memory_space<vmem>>, vector<8x32xf32>
    %c0_1 = arith.constant 0 : index
    %c0_2 = arith.constant 0 : index
    %1 = vector.load %arg2[%c0_1, %c0_2] : memref<8x32xf32, #tpu.memory_space<vmem>>, vector<8x32xf32>
    %2 = arith.mulf %0, %1 : vector<8x32xf32>
    %cst = arith.constant dense<0.000000e+00> : vector<8xf32>
    %3 = vector.multi_reduction <add>, %2, %cst [1] : vector<8x32xf32> to vector<8xf32>
    %4 = vector.shape_cast %3 : vector<8xf32> to vector<8x1xf32>
    %5 = arith.mulf %0, %0 : vector<8x32xf32>
    %cst_3 = arith.constant dense<0.000000e+00> : vector<8xf32>
    %6 = vector.multi_reduction <add>, %5, %cst_3 [1] : vector<8x32xf32> to vector<8xf32>
    %7 = vector.shape_cast %6 : vector<8xf32> to vector<8x1xf32>
    %8 = arith.mulf %1, %1 : vector<8x32xf32>
    %cst_4 = arith.constant dense<0.000000e+00> : vector<8xf32>
    %9 = vector.multi_reduction <add>, %8, %cst_4 [1] : vector<8x32xf32> to vector<8xf32>
    %10 = vector.shape_cast %9 : vector<8xf32> to vector<8x1xf32>
    %11 = arith.mulf %7, %10 : vector<8x1xf32>
    %cst_5 = arith.constant 9.99999996E-13 : f32
    %12 = vector.broadcast %cst_5 : f32 to vector<8x1xf32>
    %13 = arith.maximumf %11, %12 : vector<8x1xf32>
    %14 = math.rsqrt %13 : vector<8x1xf32>
    %15 = arith.mulf %4, %14 : vector<8x1xf32>
    %16 = vector.shape_cast %15 : vector<8x1xf32> to vector<1x8x1xf32>
    %cst_6 = arith.constant dense<0.000000e+00> : vector<1xf32>
    %17 = vector.multi_reduction <add>, %16, %cst_6 [1, 2] : vector<1x8x1xf32> to vector<1xf32>
    %18 = vector.shape_cast %17 : vector<1xf32> to vector<1x1x1xf32>
    %19 = vector.extract %18[0, 0, 0] : f32 from vector<1x1x1xf32>
    %c0_7 = arith.constant 0 : index
    %c0_8 = arith.constant 0 : index
    %20 = memref.load %arg3[%c0_7, %c0_8] : memref<1x1xf32, #tpu.memory_space<smem>>
    memref.store %19, %arg3[%c0_7, %c0_8] : memref<1x1xf32, #tpu.memory_space<smem>>
    return
  }
  func.func @transform_0(%arg0: i32) -> (i32, i32) {
    %c0_i32 = arith.constant 0 : i32
    %c0_i32_0 = arith.constant 0 : i32
    return %arg0, %c0_i32 : i32, i32
  }
  func.func @transform_1(%arg0: i32) -> (i32, i32) {
    %c0_i32 = arith.constant 0 : i32
    %c0_i32_0 = arith.constant 0 : i32
    return %arg0, %c0_i32 : i32, i32
  }
  func.func @transform_2(%arg0: i32) -> (i32, i32) {
    %c0_i32 = arith.constant 0 : i32
    %c0_i32_0 = arith.constant 0 : i32
    return %arg0, %c0_i32 : i32, i32
  }
}

</mosaic_0001>

<llo_original>
// kernel: tpu_custom_call.1
$region0: #{tpu_custom_call.1}
  #allocation0 [shape = 'u32[]', space=smem, size = 0x4, offset = 0x4, fixed_abs, tag = 'smem constant byte address 0x4 - core index']
  #allocation1 [shape = 'u32[144,128]{1,0:T(1,128)}', space=vmem, size = 0x12000, scoped, tag = 'internal scratch']
  %s0 = inlined_call_operand.hbm [shape: f32[8,32], index: 0, kind: input, shape index: {}]
  %s1 = inlined_call_operand.hbm [shape: f32[8,32], index: 1, kind: input, shape index: {}]
  %s2 = inlined_call_operand.hbm [shape: f32[1,1], index: 2, kind: output, shape index: {}]
  %s3 = sld [smem:[#allocation0]]
  $region26: #{tpu_custom_call.1} parent=0
    _
  %s5 = ssub.s32 1, %s3
  %s6 = scalar_select 0, %s5, %s3
  $region1: #{tpu_custom_call.1} parent=0
    #allocation2 [shape = 'u8[4096]{0}', space=vmem, size = 0x1000, scoped, tag = 'input window, operand 0, single buffered']
    #allocation3 [shape = 's32[1]{0}', space=sflag, size = 0x4, scoped, tag = 'scoped memory for tpu_custom_call.1']
    #allocation4 [shape = 's32[1]{0}', space=sflag, size = 0x4, scoped, tag = 'scoped memory for tpu_custom_call.1']
    #allocation5 [shape = 'u8[4096]{0}', space=vmem, size = 0x1000, scoped, tag = 'input window, operand 1, single buffered']
    #allocation6 [shape = 's32[1]{0}', space=sflag, size = 0x4, scoped, tag = 'scoped memory for tpu_custom_call.1']
    #allocation7 [shape = 'u8[512]{0}', space=smem, size = 0x200, scoped, tag = 'output window, operand 0, single buffered']
    %7 = vsyncpa [#allocation3], 0
    %8 = vsyncpa [#allocation6], 0
    %9 = vsyncpa [#allocation4], 0
    // Predicated region
    $region2: #{tpu_custom_call.1} parent=1 // pred_check
      _
    $region3: #{tpu_custom_call.1} parent=1 // pred_check_branch
      %11 = sbr.rel (0) target = $region5
    $region4: #{tpu_custom_call.1} parent=1 // pred_region
      %s13 = ssub.s32 128, 128
      %14 = vsyncadd [#allocation3], %s13
      %s16 = sshll.u32 [#allocation2], 4
      %s17 = int_to_ptr.vmem [resolvable:$true] %s16
      %19 = dma.hbm_to_vmem [thread:$0]  %s0, 128, %s17, [#allocation3]
    $region5: #{tpu_custom_call.1} parent=1 // pred_fallthru
      _
    // Predicated region
    $region6: #{tpu_custom_call.1} parent=1 // pred_check
      _
    $region7: #{tpu_custom_call.1} parent=1 // pred_check_branch
      %21 = sbr.rel (0) target = $region9
    $region8: #{tpu_custom_call.1} parent=1 // pred_region
      %s23 = ssub.s32 128, 128
      %24 = vsyncadd [#allocation6], %s23
      %s26 = sshll.u32 [#allocation5], 4
      %s27 = int_to_ptr.vmem [resolvable:$true] %s26
      %29 = dma.hbm_to_vmem [thread:$0]  %s1, 128, %s27, [#allocation6]
    $region9: #{tpu_custom_call.1} parent=1 // pred_fallthru
      _
    // Predicated region
    $region10: #{tpu_custom_call.1} parent=1 // pred_check
      _
    $region11: #{tpu_custom_call.1} parent=1 // pred_check_branch
      %31 = sbr.rel (0) target = $region13
    $region12: #{tpu_custom_call.1} parent=1 // pred_region
      %32 = dma.done [#allocation3], 128
    $region13: #{tpu_custom_call.1} parent=1 // pred_fallthru
      _
    // Predicated region
    $region14: #{tpu_custom_call.1} parent=1 // pred_check
      _
    $region15: #{tpu_custom_call.1} parent=1 // pred_check_branch
      %34 = sbr.rel (0) target = $region17
    $region16: #{tpu_custom_call.1} parent=1 // pred_region
      %35 = dma.done [#allocation6], 128
    $region17: #{tpu_custom_call.1} parent=1 // pred_fallthru
      _
    %v36 = vld [vmem:[#allocation2] sm:$0xff]
    %v37 = vld [vmem:[#allocation5] sm:$0xff]
    %v38 = vmul.f32 %v36, %v37
    %vm39 = vcmask 261120
    %v40 = vsel %vm39, %v38, 0.0
    %41 = vadd.xlane.f32.xlu0 %v40
    %v42 = vpop.xlane.xlu0 %41
    %v43 = vmul.f32 %v36, %v36
    %v44 = vsel %vm39, %v43, 0.0
    %45 = vadd.xlane.f32.xlu0 %v44
    %v46 = vpop.xlane.xlu0 %45
    %v47 = vmul.f32 %v37, %v37
    %v48 = vsel %vm39, %v47, 0.0
    %49 = vadd.xlane.f32.xlu0 %v48
    %v50 = vpop.xlane.xlu0 %49
    %v51 = vmul.f32 %v46, %v50
    %v52 = vmax.f32 %v51, 1e-12
    %v53 = vrsqrt.pop %v52
    %v54 = vmul.f32 %v42, %v53
    %vm55 = vcmask 7168
    %v56 = vsel %vm55, %v54, 0.0
    %57 = vadd.xlane.f32.xlu0 %v56
    %v58 = vpop.xlane.xlu0 %57
    %v59 = vrot.slane %v58, 4
    %v60 = vadd.f32 %v58, %v59
    %v61 = vrot.slane %v60, 2
    %v62 = vadd.f32 %v60, %v61
    %v63 = vrot.slane %v62, 1
    %v64 = vadd.f32 %v62, %v63
    %s65 = vtos %v64
    %s66 = scalar_lea.smem [#allocation7], 0
    %67 = sst [smem:[%s66]] %s65
    // Predicated region
    $region18: #{tpu_custom_call.1} parent=1 // pred_check
      _
    $region19: #{tpu_custom_call.1} parent=1 // pred_check_branch
      %69 = sbr.rel (0) target = $region21
    $region20: #{tpu_custom_call.1} parent=1 // pred_region
      %s71 = ssub.s32 16, 16
      %72 = vsyncadd [#allocation4], %s71
      %75 = dma.smem_to_hbm [#allocation7], 16, %s2, [#allocation4]
    $region21: #{tpu_custom_call.1} parent=1 // pred_fallthru
      _
    // Predicated region
    $region22: #{tpu_custom_call.1} parent=1 // pred_check
      _
    $region23: #{tpu_custom_call.1} parent=1 // pred_check_branch
      %77 = sbr.rel (0) target = $region25
    $region24: #{tpu_custom_call.1} parent=1 // pred_region
      %78 = dma.done [#allocation4], 16
    $region25: #{tpu_custom_call.1} parent=1 // pred_fallthru
      _
    %79 = sfence
    %80 = vsyncpa [#allocation3], 1
    %81 = vsyncpa [#allocation6], 1
    %82 = vsyncpa [#allocation4], 1

</llo_original>
